<compile_context>
chip_gen: v7x
topology: tpu7x:2x2x1
jax: 0.10.0
libtpu: 0.0.40
codegen_flags: <defaults>
</compile_context>

<pallas_src>
import functools

import jax
import jax.numpy as jnp
from jax.experimental import pallas as pl
from jax.experimental.pallas import tpu as pltpu

# --- synthetic dqn_config (deterministic, in-script) -------------------------
BATCH = 8          # small demo batch
IN_DIM = 32        # flattened feature dim after input adapters
HIDDEN = 128       # hidden width of the MLP streams
NUM_ACTIONS = 4    # action-space size
NUM_ATOMS = 51     # categorical['num_atoms'] (classic C51)
TEMPERATURE = 1.0  # dqn_config['temperature']

ATOM_PAD = 128     # atoms padded 51 -> 128 lanes per action (vreg-aligned)
NEG_BIG = -1e30    # bias on padded lanes: exp underflows to exactly 0


def _dqn_cat_kernel(x_ref, w1_ref, b1_ref, w2_ref, b2_ref, w3_ref, b3_ref,
                    out_ref, *, num_actions, num_atoms, atom_pad):
    """One batch tile: 3 bf16 matmuls + ReLU + per-action softmax (f32)."""
    x = x_ref[...].astype(jnp.bfloat16)                          # (TB, D)

    h1 = jnp.dot(x, w1_ref[...], preferred_element_type=jnp.float32)
    h1 = jnp.maximum(h1 + b1_ref[...], 0.0)                      # (TB, H) f32

    h2 = jnp.dot(h1.astype(jnp.bfloat16), w2_ref[...],
                 preferred_element_type=jnp.float32)
    h2 = jnp.maximum(h2 + b2_ref[...], 0.0)                      # (TB, H) f32

    # Temperature is pre-folded into w3/b3; padded lanes carry -1e30 bias
    # (bias stays f32 so padded lanes stay strictly below the real max).
    logits = jnp.dot(h2.astype(jnp.bfloat16), w3_ref[...],
                     preferred_element_type=jnp.float32)
    logits = logits + b3_ref[...]                                # (TB, A*128)

    # Softmax per action over a 128-lane-aligned slice.  Padded lanes
    # contribute exp(-1e30 - m) == 0, so the distribution is exact over the
    # real atoms.  Exact division keeps each row summing to 1 within f32
    # rounding.  A is tiny; the Python loop unrolls.  De-pad is fused: only
    # the real `num_atoms` lanes per action are stored (no extra HBM pass).
    for a in range(num_actions):
        la = logits[:, a * atom_pad:(a + 1) * atom_pad]          # (TB, 128)
        m = jnp.max(la, axis=-1, keepdims=True)
        e = jnp.exp(la - m)
        s = jnp.sum(e, axis=-1, keepdims=True)
        p = e / s                                                # exact norm
        out_ref[:, a, :] = p[:, :num_atoms]                      # (TB, K)


def prepare_params(params, *, num_actions=NUM_ACTIONS, num_atoms=NUM_ATOMS,
                   atom_pad=ATOM_PAD, temperature=TEMPERATURE):
    """Fold 1/T into the last layer, pad atoms to 128, cast weights to bf16."""
    w1, b1, w2, b2, w3, b3 = params
    hidden = w3.shape[0]

    w3 = jnp.asarray(w3, jnp.float32)
    b3 = jnp.asarray(b3, jnp.float32)
    if float(temperature) != 1.0:                  # static elision when T == 1
        inv_t = jnp.float32(1.0 / float(temperature))
        w3 = w3 * inv_t
        b3 = b3 * inv_t

    w3r = w3.reshape(hidden, num_actions, num_atoms)
    b3r = b3.reshape(1, num_actions, num_atoms)

    w3p = jnp.zeros((hidden, num_actions, atom_pad), jnp.float32)
    w3p = w3p.at[:, :, :num_atoms].set(w3r)
    w3p = w3p.reshape(hidden, num_actions * atom_pad)
    b3p = jnp.full((1, num_actions, atom_pad), NEG_BIG, jnp.float32)
    b3p = b3p.at[:, :, :num_atoms].set(b3r)
    b3p = b3p.reshape(1, num_actions * atom_pad)

    # bf16 weights feed the MXU natively on v5e/v6e/v7x; biases (including
    # the -1e30 padded lanes) remain f32.
    return (jnp.asarray(w1, jnp.bfloat16), jnp.asarray(b1, jnp.float32),
            jnp.asarray(w2, jnp.bfloat16), jnp.asarray(b2, jnp.float32),
            w3p.astype(jnp.bfloat16), b3p)


def _choose_batch_tile(batch):
    """Big tiles amortize ~0.35 us/grid-step; keep >=2 steps for v7x's 2 TCs."""
    if batch <= 16:
        return batch
    target = min(1024, max(8, batch // 2))
    return max(8, (target // 8) * 8)


def dqn_optical_cat_forward(x, params, *, num_actions=NUM_ACTIONS,
                            num_atoms=NUM_ATOMS, temperature=TEMPERATURE,
                            batch_tile=None):
    """Full categorical-DQN forward: batch-tiled grid, weights resident."""
    prepared = prepare_params(params, num_actions=num_actions,
                              num_atoms=num_atoms, atom_pad=ATOM_PAD,
                              temperature=temperature)
    w1, b1, w2, b2, w3p, b3p = prepared

    batch, in_dim = x.shape
    hidden = w1.shape[1]
    n_pad = num_actions * ATOM_PAD

    if batch_tile is None:
        batch_tile = _choose_batch_tile(batch)
    assert batch_tile % 8 == 0 or batch_tile >= batch, (
        "batch_tile must be a multiple of 8 (or cover the whole batch)")

    # Ragged batches: zero-pad rows to a tile multiple; padded rows produce
    # finite (uniform-ish) distributions and are row-sliced away afterwards.
    grid_steps = pl.cdiv(batch, batch_tile)
    padded_batch = grid_steps * batch_tile
    if padded_batch != batch:
        x = jnp.pad(x, ((0, padded_batch - batch), (0, 0)))

    kernel = functools.partial(_dqn_cat_kernel, num_actions=num_actions,
                               num_atoms=num_atoms, atom_pad=ATOM_PAD)

    flops = 2 * padded_batch * (in_dim * hidden + hidden * hidden
                                + hidden * n_pad)
    transcendentals = padded_batch * n_pad  # exps
    bytes_accessed = (4 * padded_batch * in_dim                     # x
                      + 2 * (in_dim * hidden + hidden * hidden
                             + hidden * n_pad)                      # bf16 W
                      + 4 * (2 * hidden + n_pad)                    # f32 bias
                      + 4 * padded_batch * num_actions * num_atoms)  # out

    out = pl.pallas_call(
        kernel,
        out_shape=jax.ShapeDtypeStruct((padded_batch, num_actions, num_atoms),
                                       jnp.float32),
        grid=(grid_steps,),
        in_specs=[
            pl.BlockSpec((batch_tile, in_dim), lambda i: (i, 0)),
            pl.BlockSpec((in_dim, hidden), lambda i: (0, 0)),   # grid-invariant
            pl.BlockSpec((1, hidden), lambda i: (0, 0)),
            pl.BlockSpec((hidden, hidden), lambda i: (0, 0)),
            pl.BlockSpec((1, hidden), lambda i: (0, 0)),
            pl.BlockSpec((hidden, n_pad), lambda i: (0, 0)),
            pl.BlockSpec((1, n_pad), lambda i: (0, 0)),
        ],
        out_specs=pl.BlockSpec((batch_tile, num_actions, num_atoms),
                               lambda i: (i, 0, 0)),
        compiler_params=pltpu.CompilerParams(
            dimension_semantics=("parallel",)),
        cost_estimate=pl.CostEstimate(flops=flops,
                                      transcendentals=transcendentals,
                                      bytes_accessed=bytes_accessed),
    )(x, w1, b1, w2, b2, w3p, b3p)

    if padded_batch != batch:
        out = out[:batch]          # cheap row slice (no full-width re-pass)
    return out


def init_params(key):
    """Deterministic synthetic parameters (shapes implied by the streams)."""
    k1, k2, k3 = jax.random.split(key, 3)
    scale1 = 1.0 / jnp.sqrt(IN_DIM)
    scale2 = 1.0 / jnp.sqrt(HIDDEN)
    w1 = jax.random.normal(k1, (IN_DIM, HIDDEN), jnp.float32) * scale1
    b1 = jnp.zeros((1, HIDDEN), jnp.float32)
    w2 = jax.random.normal(k2, (HIDDEN, HIDDEN), jnp.float32) * scale2
    b2 = jnp.zeros((1, HIDDEN), jnp.float32)
    w3 = jax.random.normal(k3, (HIDDEN, NUM_ACTIONS * NUM_ATOMS),
                           jnp.float32) * scale2
    b3 = jnp.zeros((1, NUM_ACTIONS * NUM_ATOMS), jnp.float32)
    return (w1, b1, w2, b2, w3, b3)


def reference_forward(x, params, *, matmul_dtype=jnp.float32,
                      temperature=TEMPERATURE):
    """Pure-JAX reference (matmul_dtype=bf16 mirrors the kernel's MXU path)."""
    w1, b1, w2, b2, w3, b3 = params

    def mm(a, b):
        return jnp.dot(a.astype(matmul_dtype), b.astype(matmul_dtype),
                       preferred_element_type=jnp.float32)

    h1 = jnp.maximum(mm(x, w1) + b1, 0.0)
    h2 = jnp.maximum(mm(h1, w2) + b2, 0.0)
    logits = (mm(h2, w3) + b3) / temperature
    logits = logits.reshape(x.shape[0], NUM_ACTIONS, NUM_ATOMS)
    return jax.nn.softmax(logits, axis=-1)


def _check(probs, x, params):
    ref_bf16 = reference_forward(x, params, matmul_dtype=jnp.bfloat16)
    ref_f32 = reference_forward(x, params, matmul_dtype=jnp.float32)
    assert probs.shape == (x.shape[0], NUM_ACTIONS, NUM_ATOMS)
    assert bool(jnp.all(jnp.isfinite(probs)))
    # Tight vs. a reference that mirrors the kernel's bf16 matmul numerics.
    assert jnp.allclose(probs, ref_bf16, atol=1e-3, rtol=1e-2)
    # Loose vs. the pure-f32 module semantics (bf16 MXU operands).
    assert jnp.allclose(probs, ref_f32, atol=2e-2)
    # Exact-division softmax: rows sum to 1 within f32 rounding.
    assert jnp.allclose(jnp.sum(probs, axis=-1), 1.0, atol=1e-4)


# TODO(synk): adapter.RnnInputAdapter / InputAdapter / QValueAdapter /
# ActionAdapter are config-driven glue outside forward(); only forward() is
# implemented here.

if __name__ == "__main__":
    key = jax.random.PRNGKey(0)
    kx, kp, kx2, kx3 = jax.random.split(key, 4)
    params = init_params(kp)

    # Small demo batch (single grid step).
    x = jax.random.normal(kx, (BATCH, IN_DIM), jnp.float32)
    probs = jax.block_until_ready(dqn_optical_cat_forward(x, params))
    _check(probs, x, params)

    # Multi-step batch grid (weights resident across steps).
    x2 = jax.random.normal(kx2, (64, IN_DIM), jnp.float32)
    probs2 = jax.block_until_ready(
        dqn_optical_cat_forward(x2, params, batch_tile=16))
    _check(probs2, x2, params)

    # Ragged batch (not divisible by the tile) -> padded grid + row slice.
    x3 = jax.random.normal(kx3, (20, IN_DIM), jnp.float32)
    probs3 = jax.block_until_ready(dqn_optical_cat_forward(x3, params))
    _check(probs3, x3, params)

    print("KERNEL_OK")
</pallas_src>

<mosaic_0001>
module attributes {stable_mosaic.version = 11 : i64} {
  func.func @_dqn_cat_kernel(%arg0: i32, %arg1: memref<8x32xf32, #tpu.memory_space<vmem>>, %arg2: memref<32x128xbf16, #tpu.memory_space<vmem>>, %arg3: memref<1x128xf32, #tpu.memory_space<vmem>>, %arg4: memref<128x128xbf16, #tpu.memory_space<vmem>>, %arg5: memref<1x128xf32, #tpu.memory_space<vmem>>, %arg6: memref<128x512xbf16, #tpu.memory_space<vmem>>, %arg7: memref<1x512xf32, #tpu.memory_space<vmem>>, %arg8: memref<8x4x51xf32, #tpu.memory_space<vmem>>) attributes {dimension_semantics = [#tpu.dimension_semantics<parallel>], iteration_bounds = array<i64: 1>, scalar_prefetch = 0 : i64, scratch_operands = 0 : i64, tpu.core_type = #tpu.core_type<tc>, window_params = [{transform_indices = @transform_0, window_bounds = array<i64: 8, 32>}, {pipeline_mode = #tpu.pipeline_mode<synchronous>, transform_indices = @transform_1, window_bounds = array<i64: 32, 128>}, {pipeline_mode = #tpu.pipeline_mode<synchronous>, transform_indices = @transform_2, window_bounds = array<i64: 1, 128>}, {pipeline_mode = #tpu.pipeline_mode<synchronous>, transform_indices = @transform_3, window_bounds = array<i64: 128, 128>}, {pipeline_mode = #tpu.pipeline_mode<synchronous>, transform_indices = @transform_4, window_bounds = array<i64: 1, 128>}, {pipeline_mode = #tpu.pipeline_mode<synchronous>, transform_indices = @transform_5, window_bounds = array<i64: 128, 512>}, {pipeline_mode = #tpu.pipeline_mode<synchronous>, transform_indices = @transform_6, window_bounds = array<i64: 1, 512>}, {transform_indices = @transform_7, window_bounds = array<i64: 8, 4, 51>}]} {
    %c0 = arith.constant 0 : index
    %c0_0 = arith.constant 0 : index
    %0 = vector.load %arg1[%c0, %c0_0] : memref<8x32xf32, #tpu.memory_space<vmem>>, vector<8x32xf32>
    %1 = arith.truncf %0 : vector<8x32xf32> to vector<8x32xbf16>
    %c0_1 = arith.constant 0 : index
    %c0_2 = arith.constant 0 : index
    %2 = vector.load %arg2[%c0_1, %c0_2] : memref<32x128xbf16, #tpu.memory_space<vmem>>, vector<32x128xbf16>
    %cst = arith.constant dense<0.000000e+00> : vector<8x128xf32>
    %3 = tpu.matmul %1, %2, %cst {dimension_numbers = #tpu.dot_dimension_numbers<[1], [0], [0], [1], [0, 0, 1, 1], [], []>} : vector<8x32xbf16>, vector<32x128xbf16>, vector<8x128xf32> -> vector<8x128xf32>
    %c0_3 = arith.constant 0 : index
    %c0_4 = arith.constant 0 : index
    %4 = vector.load %arg3[%c0_3, %c0_4] : memref<1x128xf32, #tpu.memory_space<vmem>>, vector<1x128xf32>
    %5 = vector.broadcast %4 : vector<1x128xf32> to vector<8x128xf32>
    %6 = arith.addf %3, %5 : vector<8x128xf32>
    %cst_5 = arith.constant 0.000000e+00 : f32
    %7 = vector.broadcast %cst_5 : f32 to vector<8x128xf32>
    %8 = arith.maximumf %6, %7 : vector<8x128xf32>
    %9 = arith.truncf %8 : vector<8x128xf32> to vector<8x128xbf16>
    %c0_6 = arith.constant 0 : index
    %c0_7 = arith.constant 0 : index
    %10 = vector.load %arg4[%c0_6, %c0_7] : memref<128x128xbf16, #tpu.memory_space<vmem>>, vector<128x128xbf16>
    %cst_8 = arith.constant dense<0.000000e+00> : vector<8x128xf32>
    %11 = tpu.matmul %9, %10, %cst_8 {dimension_numbers = #tpu.dot_dimension_numbers<[1], [0], [0], [1], [0, 0, 1, 1], [], []>} : vector<8x128xbf16>, vector<128x128xbf16>, vector<8x128xf32> -> vector<8x128xf32>
    %c0_9 = arith.constant 0 : index
    %c0_10 = arith.constant 0 : index
    %12 = vector.load %arg5[%c0_9, %c0_10] : memref<1x128xf32, #tpu.memory_space<vmem>>, vector<1x128xf32>
    %13 = vector.broadcast %12 : vector<1x128xf32> to vector<8x128xf32>
    %14 = arith.addf %11, %13 : vector<8x128xf32>
    %cst_11 = arith.constant 0.000000e+00 : f32
    %15 = vector.broadcast %cst_11 : f32 to vector<8x128xf32>
    %16 = arith.maximumf %14, %15 : vector<8x128xf32>
    %17 = arith.truncf %16 : vector<8x128xf32> to vector<8x128xbf16>
    %c0_12 = arith.constant 0 : index
    %c0_13 = arith.constant 0 : index
    %18 = vector.load %arg6[%c0_12, %c0_13] : memref<128x512xbf16, #tpu.memory_space<vmem>>, vector<128x512xbf16>
    %cst_14 = arith.constant dense<0.000000e+00> : vector<8x512xf32>
    %19 = tpu.matmul %17, %18, %cst_14 {dimension_numbers = #tpu.dot_dimension_numbers<[1], [0], [0], [1], [0, 0, 1, 1], [], []>} : vector<8x128xbf16>, vector<128x512xbf16>, vector<8x512xf32> -> vector<8x512xf32>
    %c0_15 = arith.constant 0 : index
    %c0_16 = arith.constant 0 : index
    %20 = vector.load %arg7[%c0_15, %c0_16] : memref<1x512xf32, #tpu.memory_space<vmem>>, vector<1x512xf32>
    %21 = vector.broadcast %20 : vector<1x512xf32> to vector<8x512xf32>
    %22 = arith.addf %19, %21 : vector<8x512xf32>
    %23 = vector.extract_strided_slice %22 {offsets = [0, 0], sizes = [8, 128], strides = [1, 1]} : vector<8x512xf32> to vector<8x128xf32>
    %cst_17 = arith.constant dense<0xFF800000> : vector<8xf32>
    %24 = vector.multi_reduction <maximumf>, %23, %cst_17 [1] : vector<8x128xf32> to vector<8xf32>
    %25 = vector.shape_cast %24 : vector<8xf32> to vector<8x1xf32>
    %26 = vector.broadcast %25 : vector<8x1xf32> to vector<8x128xf32>
    %27 = arith.subf %23, %26 : vector<8x128xf32>
    %28 = math.exp %27 : vector<8x128xf32>
    %cst_18 = arith.constant dense<0.000000e+00> : vector<8xf32>
    %29 = vector.multi_reduction <add>, %28, %cst_18 [1] : vector<8x128xf32> to vector<8xf32>
    %30 = vector.shape_cast %29 : vector<8xf32> to vector<8x1xf32>
    %31 = vector.broadcast %30 : vector<8x1xf32> to vector<8x128xf32>
    %32 = arith.divf %28, %31 : vector<8x128xf32>
    %33 = vector.extract_strided_slice %32 {offsets = [0, 0], sizes = [8, 51], strides = [1, 1]} : vector<8x128xf32> to vector<8x51xf32>
    %c0_19 = arith.constant 0 : index
    %c0_20 = arith.constant 0 : index
    %c0_21 = arith.constant 0 : index
    %34 = vector.load %arg8[%c0_19, %c0_20, %c0_21] : memref<8x4x51xf32, #tpu.memory_space<vmem>>, vector<8x1x51xf32>
    %35 = vector.shape_cast %34 : vector<8x1x51xf32> to vector<8x51xf32>
    %36 = vector.shape_cast %33 : vector<8x51xf32> to vector<8x1x51xf32>
    tpu.vector_store %arg8[%c0_19, %c0_20, %c0_21], %36 {strides = array<i32>} : memref<8x4x51xf32, #tpu.memory_space<vmem>>, vector<8x1x51xf32>,
    %37 = vector.extract_strided_slice %22 {offsets = [0, 128], sizes = [8, 128], strides = [1, 1]} : vector<8x512xf32> to vector<8x128xf32>
    %cst_22 = arith.constant dense<0xFF800000> : vector<8xf32>
    %38 = vector.multi_reduction <maximumf>, %37, %cst_22 [1] : vector<8x128xf32> to vector<8xf32>
    %39 = vector.shape_cast %38 : vector<8xf32> to vector<8x1xf32>
    %40 = vector.broadcast %39 : vector<8x1xf32> to vector<8x128xf32>
    %41 = arith.subf %37, %40 : vector<8x128xf32>
    %42 = math.exp %41 : vector<8x128xf32>
    %cst_23 = arith.constant dense<0.000000e+00> : vector<8xf32>
    %43 = vector.multi_reduction <add>, %42, %cst_23 [1] : vector<8x128xf32> to vector<8xf32>
    %44 = vector.shape_cast %43 : vector<8xf32> to vector<8x1xf32>
    %45 = vector.broadcast %44 : vector<8x1xf32> to vector<8x128xf32>
    %46 = arith.divf %42, %45 : vector<8x128xf32>
    %47 = vector.extract_strided_slice %46 {offsets = [0, 0], sizes = [8, 51], strides = [1, 1]} : vector<8x128xf32> to vector<8x51xf32>
    %c0_24 = arith.constant 0 : index
    %c1 = arith.constant 1 : index
    %c0_25 = arith.constant 0 : index
    %48 = vector.load %arg8[%c0_24, %c1, %c0_25] : memref<8x4x51xf32, #tpu.memory_space<vmem>>, vector<8x1x51xf32>
    %49 = vector.shape_cast %48 : vector<8x1x51xf32> to vector<8x51xf32>
    %50 = vector.shape_cast %47 : vector<8x51xf32> to vector<8x1x51xf32>
    tpu.vector_store %arg8[%c0_24, %c1, %c0_25], %50 {strides = array<i32>} : memref<8x4x51xf32, #tpu.memory_space<vmem>>, vector<8x1x51xf32>,
    %51 = vector.extract_strided_slice %22 {offsets = [0, 256], sizes = [8, 128], strides = [1, 1]} : vector<8x512xf32> to vector<8x128xf32>
    %cst_26 = arith.constant dense<0xFF800000> : vector<8xf32>
    %52 = vector.multi_reduction <maximumf>, %51, %cst_26 [1] : vector<8x128xf32> to vector<8xf32>
    %53 = vector.shape_cast %52 : vector<8xf32> to vector<8x1xf32>
    %54 = vector.broadcast %53 : vector<8x1xf32> to vector<8x128xf32>
    %55 = arith.subf %51, %54 : vector<8x128xf32>
    %56 = math.exp %55 : vector<8x128xf32>
    %cst_27 = arith.constant dense<0.000000e+00> : vector<8xf32>
    %57 = vector.multi_reduction <add>, %56, %cst_27 [1] : vector<8x128xf32> to vector<8xf32>
    %58 = vector.shape_cast %57 : vector<8xf32> to vector<8x1xf32>
    %59 = vector.broadcast %58 : vector<8x1xf32> to vector<8x128xf32>
    %60 = arith.divf %56, %59 : vector<8x128xf32>
    %61 = vector.extract_strided_slice %60 {offsets = [0, 0], sizes = [8, 51], strides = [1, 1]} : vector<8x128xf32> to vector<8x51xf32>
    %c0_28 = arith.constant 0 : index
    %c2 = arith.constant 2 : index
    %c0_29 = arith.constant 0 : index
    %62 = vector.load %arg8[%c0_28, %c2, %c0_29] : memref<8x4x51xf32, #tpu.memory_space<vmem>>, vector<8x1x51xf32>
    %63 = vector.shape_cast %62 : vector<8x1x51xf32> to vector<8x51xf32>
    %64 = vector.shape_cast %61 : vector<8x51xf32> to vector<8x1x51xf32>
    tpu.vector_store %arg8[%c0_28, %c2, %c0_29], %64 {strides = array<i32>} : memref<8x4x51xf32, #tpu.memory_space<vmem>>, vector<8x1x51xf32>,
    %65 = vector.extract_strided_slice %22 {offsets = [0, 384], sizes = [8, 128], strides = [1, 1]} : vector<8x512xf32> to vector<8x128xf32>
    %cst_30 = arith.constant dense<0xFF800000> : vector<8xf32>
    %66 = vector.multi_reduction <maximumf>, %65, %cst_30 [1] : vector<8x128xf32> to vector<8xf32>
    %67 = vector.shape_cast %66 : vector<8xf32> to vector<8x1xf32>
    %68 = vector.broadcast %67 : vector<8x1xf32> to vector<8x128xf32>
    %69 = arith.subf %65, %68 : vector<8x128xf32>
    %70 = math.exp %69 : vector<8x128xf32>
    %cst_31 = arith.constant dense<0.000000e+00> : vector<8xf32>
    %71 = vector.multi_reduction <add>, %70, %cst_31 [1] : vector<8x128xf32> to vector<8xf32>
    %72 = vector.shape_cast %71 : vector<8xf32> to vector<8x1xf32>
    %73 = vector.broadcast %72 : vector<8x1xf32> to vector<8x128xf32>
    %74 = arith.divf %70, %73 : vector<8x128xf32>
    %75 = vector.extract_strided_slice %74 {offsets = [0, 0], sizes = [8, 51], strides = [1, 1]} : vector<8x128xf32> to vector<8x51xf32>
    %c0_32 = arith.constant 0 : index
    %c3 = arith.constant 3 : index
    %c0_33 = arith.constant 0 : index
    %76 = vector.load %arg8[%c0_32, %c3, %c0_33] : memref<8x4x51xf32, #tpu.memory_space<vmem>>, vector<8x1x51xf32>
    %77 = vector.shape_cast %76 : vector<8x1x51xf32> to vector<8x51xf32>
    %78 = vector.shape_cast %75 : vector<8x51xf32> to vector<8x1x51xf32>
    tpu.vector_store %arg8[%c0_32, %c3, %c0_33], %78 {strides = array<i32>} : memref<8x4x51xf32, #tpu.memory_space<vmem>>, vector<8x1x51xf32>,
    return
  }
  func.func @transform_0(%arg0: i32) -> (i32, i32) {
    %c0_i32 = arith.constant 0 : i32
    %c0_i32_0 = arith.constant 0 : i32
    return %arg0, %c0_i32 : i32, i32
  }
  func.func @transform_1(%arg0: i32) -> (i32, i32) {
    %c0_i32 = arith.constant 0 : i32
    %c0_i32_0 = arith.constant 0 : i32
    %c0_i32_1 = arith.constant 0 : i32
    return %c0_i32, %c0_i32_0 : i32, i32
  }
  func.func @transform_2(%arg0: i32) -> (i32, i32) {
    %c0_i32 = arith.constant 0 : i32
    %c0_i32_0 = arith.constant 0 : i32
    %c0_i32_1 = arith.constant 0 : i32
    return %c0_i32, %c0_i32_0 : i32, i32
  }
  func.func @transform_3(%arg0: i32) -> (i32, i32) {
    %c0_i32 = arith.constant 0 : i32
    %c0_i32_0 = arith.constant 0 : i32
    %c0_i32_1 = arith.constant 0 : i32
    return %c0_i32, %c0_i32_0 : i32, i32
  }
  func.func @transform_4(%arg0: i32) -> (i32, i32) {
    %c0_i32 = arith.constant 0 : i32
    %c0_i32_0 = arith.constant 0 : i32
    %c0_i32_1 = arith.constant 0 : i32
    return %c0_i32, %c0_i32_0 : i32, i32
  }
  func.func @transform_5(%arg0: i32) -> (i32, i32) {
    %c0_i32 = arith.constant 0 : i32
    %c0_i32_0 = arith.constant 0 : i32
    %c0_i32_1 = arith.constant 0 : i32
    return %c0_i32, %c0_i32_0 : i32, i32
  }
  func.func @transform_6(%arg0: i32) -> (i32, i32) {
    %c0_i32 = arith.constant 0 : i32
    %c0_i32_0 = arith.constant 0 : i32
    %c0_i32_1 = arith.constant 0 : i32
    return %c0_i32, %c0_i32_0 : i32, i32
  }
  func.func @transform_7(%arg0: i32) -> (i32, i32, i32) {
    %c0_i32 = arith.constant 0 : i32
    %c0_i32_0 = arith.constant 0 : i32
    %c0_i32_1 = arith.constant 0 : i32
    return %arg0, %c0_i32, %c0_i32_0 : i32, i32, i32
  }
}

</mosaic_0001>

<llo_original>
// kernel: tpu_custom_call.1
$region0: #{tpu_custom_call.1}
  #allocation0 [shape = 'u32[]', space=smem, size = 0x4, offset = 0x4, fixed_abs, tag = 'smem constant byte address 0x4 - core index']
  #allocation1 [shape = 'u32[144,128]{1,0:T(1,128)}', space=vmem, size = 0x12000, scoped, tag = 'internal scratch']
  %s0 = inlined_call_operand.hbm [shape: f32[8,32], index: 0, kind: input, shape index: {}]
  %s1 = inlined_call_operand.hbm [shape: bf16[32,128], index: 1, kind: input, shape index: {}]
  %s2 = inlined_call_operand.vmem [shape: f32[1,128], index: 2, kind: input, shape index: {}]
  %s3 = inlined_call_operand.hbm [shape: bf16[128,128], index: 3, kind: input, shape index: {}]
  %s4 = inlined_call_operand.vmem [shape: f32[1,128], index: 4, kind: input, shape index: {}]
  %s5 = inlined_call_operand.hbm [shape: bf16[128,512], index: 5, kind: input, shape index: {}]
  %s6 = inlined_call_operand.vmem [shape: f32[1,512], index: 6, kind: input, shape index: {}]
  %s7 = inlined_call_operand.hbm [shape: f32[8,4,51], index: 7, kind: output, shape index: {}]
  %s8 = sld [smem:[#allocation0]]
  $region54: #{tpu_custom_call.1} parent=0
    _
  %s10 = ssub.s32 1, %s8
  %s11 = scalar_select 0, %s10, %s8
  $region1: #{tpu_custom_call.1} parent=0
    #allocation2 [shape = 'u8[4096]{0}', space=vmem, size = 0x1000, scoped, tag = 'input window, operand 0, single buffered']
    #allocation3 [shape = 's32[1]{0}', space=sflag, size = 0x4, scoped, tag = 'scoped memory for tpu_custom_call.1']
    #allocation4 [shape = 's32[1]{0}', space=sflag, size = 0x4, scoped, tag = 'scoped memory for tpu_custom_call.1']
    #allocation5 [shape = 'u8[8192]{0}', space=vmem, size = 0x2000, scoped, tag = 'input window, operand 1, single buffered']
    #allocation6 [shape = 's32[1]{0}', space=sflag, size = 0x4, scoped, tag = 'scoped memory for tpu_custom_call.1']
    #allocation7 [shape = 'u8[32768]{0}', space=vmem, size = 0x8000, scoped, tag = 'input window, operand 3, single buffered']
    #allocation8 [shape = 'u8[131072]{0}', space=vmem, size = 0x20000, scoped, tag = 'input window, operand 5, single buffered']
    #allocation9 [shape = 's32[1]{0}', space=sflag, size = 0x4, scoped, tag = 'scoped memory for tpu_custom_call.1']
    #allocation10 [shape = 'u8[16384]{0}', space=vmem, size = 0x4000, scoped, tag = 'output window, operand 0, single buffered']
    %12 = vsyncpa [#allocation3], 0
    %13 = vsyncpa [#allocation6], 0
    %14 = vsyncpa [#allocation9], 0
    %15 = vsyncpa [#allocation4], 0
    // Predicated region
    $region2: #{tpu_custom_call.1} parent=1 // pred_check
      _
    $region3: #{tpu_custom_call.1} parent=1 // pred_check_branch
      %17 = sbr.rel (0) target = $region5
    $region4: #{tpu_custom_call.1} parent=1 // pred_region
      %s19 = ssub.s32 128, 128
      %20 = vsyncadd [#allocation3], %s19
      %s22 = sshll.u32 [#allocation2], 4
      %s23 = int_to_ptr.vmem [resolvable:$true] %s22
      %25 = dma.hbm_to_vmem [thread:$0]  %s0, 128, %s23, [#allocation3]
    $region5: #{tpu_custom_call.1} parent=1 // pred_fallthru
      _
    // Predicated region
    $region6: #{tpu_custom_call.1} parent=1 // pred_check
      _
    $region7: #{tpu_custom_call.1} parent=1 // pred_check_branch
      %27 = sbr.rel (0) target = $region9
    $region8: #{tpu_custom_call.1} parent=1 // pred_region
      %s29 = ssub.s32 256, 256
      %30 = vsyncadd [#allocation6], %s29
      %s31 = sshll.u32 [#allocation5], 4
      %s32 = int_to_ptr.vmem [resolvable:$true] %s31
      %37 = dma.hbm_to_vmem [thread:$0]  %s1, 256, %s32, [#allocation6], 64, 64, 4
    $region9: #{tpu_custom_call.1} parent=1 // pred_fallthru
      _
    // Predicated region
    $region10: #{tpu_custom_call.1} parent=1 // pred_check
      _
    $region11: #{tpu_custom_call.1} parent=1 // pred_check_branch
      %39 = sbr.rel (0) target = $region13
    $region12: #{tpu_custom_call.1} parent=1 // pred_region
      _
    $region13: #{tpu_custom_call.1} parent=1 // pred_fallthru
      _
    // Predicated region
    $region14: #{tpu_custom_call.1} parent=1 // pred_check
      _
    $region15: #{tpu_custom_call.1} parent=1 // pred_check_branch
      %41 = sbr.rel (0) target = $region17
    $region16: #{tpu_custom_call.1} parent=1 // pred_region
      %s43 = ssub.s32 1024, 1024
      %44 = vsyncadd [#allocation6], %s43
      %s45 = sshll.u32 [#allocation7], 4
      %s46 = int_to_ptr.vmem [resolvable:$true] %s45
      %51 = dma.hbm_to_vmem [thread:$0]  %s3, 1024, %s46, [#allocation6], 64, 64, 4
    $region17: #{tpu_custom_call.1} parent=1 // pred_fallthru
      _
    // Predicated region
    $region18: #{tpu_custom_call.1} parent=1 // pred_check
      _
    $region19: #{tpu_custom_call.1} parent=1 // pred_check_branch
      %53 = sbr.rel (0) target = $region21
    $region20: #{tpu_custom_call.1} parent=1 // pred_region
      _
    $region21: #{tpu_custom_call.1} parent=1 // pred_fallthru
      _
    // Predicated region
    $region22: #{tpu_custom_call.1} parent=1 // pred_check
      _
    $region23: #{tpu_custom_call.1} parent=1 // pred_check_branch
      %55 = sbr.rel (0) target = $region25
    $region24: #{tpu_custom_call.1} parent=1 // pred_region
      %s57 = ssub.s32 4096, 4096
      %58 = vsyncadd [#allocation9], %s57
      %s59 = sshll.u32 [#allocation8], 4
      %s60 = int_to_ptr.vmem [resolvable:$true] %s59
      %65 = dma.hbm_to_vmem [thread:$0]  %s5, 4096, %s60, [#allocation9], 256, 256, 16
    $region25: #{tpu_custom_call.1} parent=1 // pred_fallthru
      _
    // Predicated region
    $region26: #{tpu_custom_call.1} parent=1 // pred_check
      _
    $region27: #{tpu_custom_call.1} parent=1 // pred_check_branch
      %67 = sbr.rel (0) target = $region29
    $region28: #{tpu_custom_call.1} parent=1 // pred_region
      _
    $region29: #{tpu_custom_call.1} parent=1 // pred_fallthru
      _
    // Predicated region
    $region30: #{tpu_custom_call.1} parent=1 // pred_check
      _
    $region31: #{tpu_custom_call.1} parent=1 // pred_check_branch
      %69 = sbr.rel (0) target = $region33
    $region32: #{tpu_custom_call.1} parent=1 // pred_region
      %70 = dma.done [#allocation3], 128
    $region33: #{tpu_custom_call.1} parent=1 // pred_fallthru
      _
    // Predicated region
    $region34: #{tpu_custom_call.1} parent=1 // pred_check
      _
    $region35: #{tpu_custom_call.1} parent=1 // pred_check_branch
      %72 = sbr.rel (0) target = $region37
    $region36: #{tpu_custom_call.1} parent=1 // pred_region
      %73 = dma.done [#allocation6], 256
    $region37: #{tpu_custom_call.1} parent=1 // pred_fallthru
      _
    // Predicated region
    $region38: #{tpu_custom_call.1} parent=1 // pred_check
      _
    $region39: #{tpu_custom_call.1} parent=1 // pred_check_branch
      %75 = sbr.rel (0) target = $region41
    $region40: #{tpu_custom_call.1} parent=1 // pred_region
      %76 = dma.done [#allocation6], 1024
    $region41: #{tpu_custom_call.1} parent=1 // pred_fallthru
      _
    // Predicated region
    $region42: #{tpu_custom_call.1} parent=1 // pred_check
      _
    $region43: #{tpu_custom_call.1} parent=1 // pred_check_branch
      %78 = sbr.rel (0) target = $region45
    $region44: #{tpu_custom_call.1} parent=1 // pred_region
      %79 = dma.done [#allocation9], 4096
    $region45: #{tpu_custom_call.1} parent=1 // pred_fallthru
      _
    %v81 = vld [vmem:[#allocation2] sm:$0xff]
    %v82 = vpack.c.bf16 %v81, %v81
    %v83 = vld [vmem:[#allocation5] sm:$0xf]
    %v84 = vld [vmem:[#allocation5 + $0x4] sm:$0xf]
    %v85 = vld [vmem:[#allocation5 + $0x8] sm:$0xf]
    %v86 = vld [vmem:[#allocation5 + $0xc] sm:$0xf]
    %v87 = vld [vmem:[%s2] sm:$0x1]
    %v89 = vlaneseq
    %v90 = vshrl.u32 %v89, 7
    %v91 = vsub.s32 0, %v90
    %v92 = vrot.slane %v87, %v91
    %v98 = vunpack.c.l.b16 %v83
    %v99 = vunpack.c.l.b16 %v84
    %v100 = vunpack.c.l.b16 %v85
    %v101 = vunpack.c.l.b16 %v86
    %v102 = vpack.c.b16 %v99, %v98
    %v103 = vpack.c.b16 %v101, %v100
    %vm106 = vcmask 261120
    %v108 = vsel %vm106, %v82, 0
    %110 = vmatprep.subr.bf16.mxu0 0
    %111 = vmatpush1.bf16.msra.mxu0 %v102
    %112 = vmatprep.subr.bf16.mxu0 0
    %113 = vmatpush1.bf16.msra.mxu0 %v103
    %114 = vmatprep.subr.bf16.mxu0 0
    %115 = vmatpush1.bf16.msra.mxu0 0
    %116 = vmatprep.subr.bf16.mxu0 0
    %117 = vmatpush1.bf16.msra.mxu0 0
    %118 = vmatprep.subr.bf16.mxu0 0
    %119 = vmatpush1.bf16.msra.mxu0 0
    %120 = vmatprep.subr.bf16.mxu0 0
    %121 = vmatpush1.bf16.msra.mxu0 0
    %122 = vmatprep.subr.bf16.mxu0 0
    %123 = vmatpush1.bf16.msra.mxu0 0
    %124 = vmatprep.subr.bf16.mxu0 0
    %125 = vmatpush1.bf16.msra.mxu0 0
    %126 = vmatprep.subr.bf16.mxu0 0
    %127 = vmatpush1.bf16.msra.mxu0 0
    %128 = vmatprep.subr.bf16.mxu0 0
    %129 = vmatpush1.bf16.msra.mxu0 0
    %130 = vmatprep.subr.bf16.mxu0 0
    %131 = vmatpush1.bf16.msra.mxu0 0
    %132 = vmatprep.subr.bf16.mxu0 0
    %133 = vmatpush1.bf16.msra.mxu0 0
    %134 = vmatprep.subr.bf16.mxu0 0
    %135 = vmatpush1.bf16.msra.mxu0 0
    %136 = vmatprep.subr.bf16.mxu0 0
    %137 = vmatpush1.bf16.msra.mxu0 0
    %138 = vmatprep.subr.bf16.mxu0 0
    %139 = vmatpush1.bf16.msra.mxu0 0
    %140 = vmatprep.subr.bf16.mxu0 0
    %141 = vmatpush1.bf16.msra.mxu0 0
    %142 = vmatprep.mubr.bf16.mxu0 0
    %143 = vmatmul.mubr.bf16.gmra.mrb[0].mxu0 %v108
    %v144 = vpop.f32.mrb[0].mxu0
    %v145 = vadd.f32 %v92, %v144
    %v146 = vpop.f32.mrb[0].mxu0
    %v147 = vpop.f32.mrb[0].mxu0
    %v148 = vpop.f32.mrb[0].mxu0
    %149 = vdwg.mxu0
    %v150 = vmax.f32 %v145, 0.0
    %v151 = vpack.c.bf16 %v150, %v150
    %v152 = vld [vmem:[#allocation7] sm:$0xf]
    %v153 = vld [vmem:[#allocation7 + $0x4] sm:$0xf]
    %v154 = vld [vmem:[#allocation7 + $0x8] sm:$0xf]
    %v155 = vld [vmem:[#allocation7 + $0xc] sm:$0xf]
    %v156 = vld [vmem:[#allocation7 + $0x10] sm:$0xf]
    %v157 = vld [vmem:[#allocation7 + $0x14] sm:$0xf]
    %v158 = vld [vmem:[#allocation7 + $0x18] sm:$0xf]
    %v159 = vld [vmem:[#allocation7 + $0x1c] sm:$0xf]
    %v160 = vld [vmem:[#allocation7 + $0x20] sm:$0xf]
    %v161 = vld [vmem:[#allocation7 + $0x24] sm:$0xf]
    %v162 = vld [vmem:[#allocation7 + $0x28] sm:$0xf]
    %v163 = vld [vmem:[#allocation7 + $0x2c] sm:$0xf]
    %v164 = vld [vmem:[#allocation7 + $0x30] sm:$0xf]
    %v165 = vld [vmem:[#allocation7 + $0x34] sm:$0xf]
    %v166 = vld [vmem:[#allocation7 + $0x38] sm:$0xf]
    %v167 = vld [vmem:[#allocation7 + $0x3c] sm:$0xf]
    %v168 = vld [vmem:[%s4] sm:$0x1]
    %v170 = vlaneseq
    %v171 = vshrl.u32 %v170, 7
    %v172 = vsub.s32 0, %v171
    %v173 = vrot.slane %v168, %v172
    %v191 = vunpack.c.l.b16 %v152
    %v192 = vunpack.c.l.b16 %v153
    %v193 = vunpack.c.l.b16 %v154
    %v194 = vunpack.c.l.b16 %v155
    %v195 = vunpack.c.l.b16 %v156
    %v196 = vunpack.c.l.b16 %v157
    %v197 = vunpack.c.l.b16 %v158
    %v198 = vunpack.c.l.b16 %v159
    %v199 = vunpack.c.l.b16 %v160
    %v200 = vunpack.c.l.b16 %v161
    %v201 = vunpack.c.l.b16 %v162
    %v202 = vunpack.c.l.b16 %v163
    %v203 = vunpack.c.l.b16 %v164
    %v204 = vunpack.c.l.b16 %v165
    %v205 = vunpack.c.l.b16 %v166
    %v206 = vunpack.c.l.b16 %v167
    %v207 = vpack.c.b16 %v192, %v191
    %v208 = vpack.c.b16 %v194, %v193
    %v209 = vpack.c.b16 %v196, %v195
    %v210 = vpack.c.b16 %v198, %v197
    %v211 = vpack.c.b16 %v200, %v199
    %v212 = vpack.c.b16 %v202, %v201
    %v213 = vpack.c.b16 %v204, %v203
    %v214 = vpack.c.b16 %v206, %v205
    %223 = vmatprep.subr.bf16.mxu0 0
    %224 = vmatpush1.bf16.msra.mxu0 %v207
    %225 = vmatprep.subr.bf16.mxu0 0
    %226 = vmatpush1.bf16.msra.mxu0 %v208
    %227 = vmatprep.subr.bf16.mxu0 0
    %228 = vmatpush1.bf16.msra.mxu0 %v209
    %229 = vmatprep.subr.bf16.mxu0 0
    %230 = vmatpush1.bf16.msra.mxu0 %v210
    %231 = vmatprep.subr.bf16.mxu0 0
    %232 = vmatpush1.bf16.msra.mxu0 %v211
    %233 = vmatprep.subr.bf16.mxu0 0
    %234 = vmatpush1.bf16.msra.mxu0 %v212
    %235 = vmatprep.subr.bf16.mxu0 0
    %236 = vmatpush1.bf16.msra.mxu0 %v213
    %237 = vmatprep.subr.bf16.mxu0 0
    %238 = vmatpush1.bf16.msra.mxu0 %v214
    %239 = vmatprep.subr.bf16.mxu0 0
    %240 = vmatpush1.bf16.msra.mxu0 0
    %241 = vmatprep.subr.bf16.mxu0 0
    %242 = vmatpush1.bf16.msra.mxu0 0
    %243 = vmatprep.subr.bf16.mxu0 0
    %244 = vmatpush1.bf16.msra.mxu0 0
    %245 = vmatprep.subr.bf16.mxu0 0
    %246 = vmatpush1.bf16.msra.mxu0 0
    %247 = vmatprep.subr.bf16.mxu0 0
    %248 = vmatpush1.bf16.msra.mxu0 0
    %249 = vmatprep.subr.bf16.mxu0 0
    %250 = vmatpush1.bf16.msra.mxu0 0
    %251 = vmatprep.subr.bf16.mxu0 0
    %252 = vmatpush1.bf16.msra.mxu0 0
    %253 = vmatprep.subr.bf16.mxu0 0
    %254 = vmatpush1.bf16.msra.mxu0 0
    %255 = vmatprep.mubr.bf16.mxu0 0
    %256 = vmatmul.mubr.bf16.gmra.mrb[0].mxu0 %v151
    %v257 = vpop.f32.mrb[0].mxu0
    %v258 = vadd.f32 %v173, %v257
    %v259 = vpop.f32.mrb[0].mxu0
    %v260 = vpop.f32.mrb[0].mxu0
    %v261 = vpop.f32.mrb[0].mxu0
    %262 = vdwg.mxu0
    %v263 = vmax.f32 %v258, 0.0
    %v264 = vpack.c.bf16 %v263, %v263
    %v265 = vld [vmem:[#allocation8] sm:$0xff]
    %v266 = vld [vmem:[#allocation8 + $0x8] sm:$0xff]
    %v267 = vld [vmem:[#allocation8 + $0x10] sm:$0xff]
    %v268 = vld [vmem:[#allocation8 + $0x18] sm:$0xff]
    %v269 = vld [vmem:[#allocation8 + $0x20] sm:$0xff]
    %v270 = vld [vmem:[#allocation8 + $0x28] sm:$0xff]
    %v271 = vld [vmem:[#allocation8 + $0x30] sm:$0xff]
    %v272 = vld [vmem:[#allocation8 + $0x38] sm:$0xff]
    %v273 = vld [vmem:[#allocation8 + $0x40] sm:$0xff]
    %v274 = vld [vmem:[#allocation8 + $0x48] sm:$0xff]
    %v275 = vld [vmem:[#allocation8 + $0x50] sm:$0xff]
    %v276 = vld [vmem:[#allocation8 + $0x58] sm:$0xff]
    %v277 = vld [vmem:[#allocation8 + $0x60] sm:$0xff]
    %v278 = vld [vmem:[#allocation8 + $0x68] sm:$0xff]
    %v279 = vld [vmem:[#allocation8 + $0x70] sm:$0xff]
    %v280 = vld [vmem:[#allocation8 + $0x78] sm:$0xff]
    %v281 = vld [vmem:[#allocation8 + $0x80] sm:$0xff]
    %v282 = vld [vmem:[#allocation8 + $0x88] sm:$0xff]
    %v283 = vld [vmem:[#allocation8 + $0x90] sm:$0xff]
    %v284 = vld [vmem:[#allocation8 + $0x98] sm:$0xff]
    %v285 = vld [vmem:[#allocation8 + $0xa0] sm:$0xff]
    %v286 = vld [vmem:[#allocation8 + $0xa8] sm:$0xff]
    %v287 = vld [vmem:[#allocation8 + $0xb0] sm:$0xff]
    %v288 = vld [vmem:[#allocation8 + $0xb8] sm:$0xff]
    %v289 = vld [vmem:[#allocation8 + $0xc0] sm:$0xff]
    %v290 = vld [vmem:[#allocation8 + $0xc8] sm:$0xff]
    %v291 = vld [vmem:[#allocation8 + $0xd0] sm:$0xff]
    %v292 = vld [vmem:[#allocation8 + $0xd8] sm:$0xff]
    %v293 = vld [vmem:[#allocation8 + $0xe0] sm:$0xff]
    %v294 = vld [vmem:[#allocation8 + $0xe8] sm:$0xff]
    %v295 = vld [vmem:[#allocation8 + $0xf0] sm:$0xff]
    %v296 = vld [vmem:[#allocation8 + $0xf8] sm:$0xff]
    %v297 = vld [vmem:[%s6] sm:$0xf]
    %v299 = vlaneseq
    %v300 = vshrl.u32 %v299, 7
    %v301 = vsub.s32 0, %v300
    %v302 = vrot.slane %v297, %v301
    %v303 = vlaneseq
    %v304 = vshrl.u32 %v303, 7
    %v305 = vsub.s32 1, %v304
    %v306 = vrot.slane %v297, %v305
    %v307 = vlaneseq
    %v308 = vshrl.u32 %v307, 7
    %v309 = vsub.s32 2, %v308
    %v310 = vrot.slane %v297, %v309
    %v311 = vlaneseq
    %v312 = vshrl.u32 %v311, 7
    %v313 = vsub.s32 3, %v312
    %v314 = vrot.slane %v297, %v313
    %v351 = vunpack.c.l.b16 %v265
    %v352 = vunpack.c.h.b16 %v265
    %v353 = vunpack.c.l.b16 %v266
    %v354 = vunpack.c.h.b16 %v266
    %v355 = vunpack.c.l.b16 %v267
    %v356 = vunpack.c.h.b16 %v267
    %v357 = vunpack.c.l.b16 %v268
    %v358 = vunpack.c.h.b16 %v268
    %v359 = vunpack.c.l.b16 %v269
    %v360 = vunpack.c.h.b16 %v269
    %v361 = vunpack.c.l.b16 %v270
    %v362 = vunpack.c.h.b16 %v270
    %v363 = vunpack.c.l.b16 %v271
    %v364 = vunpack.c.h.b16 %v271
    %v365 = vunpack.c.l.b16 %v272
    %v366 = vunpack.c.h.b16 %v272
    %v367 = vunpack.c.l.b16 %v273
    %v368 = vunpack.c.h.b16 %v273
    %v369 = vunpack.c.l.b16 %v274
    %v370 = vunpack.c.h.b16 %v274
    %v371 = vunpack.c.l.b16 %v275
    %v372 = vunpack.c.h.b16 %v275
    %v373 = vunpack.c.l.b16 %v276
    %v374 = vunpack.c.h.b16 %v276
    %v375 = vunpack.c.l.b16 %v277
    %v376 = vunpack.c.h.b16 %v277
    %v377 = vunpack.c.l.b16 %v278
    %v378 = vunpack.c.h.b16 %v278
    %v379 = vunpack.c.l.b16 %v279
    %v380 = vunpack.c.h.b16 %v279
    %v381 = vunpack.c.l.b16 %v280
    %v382 = vunpack.c.h.b16 %v280
    %v383 = vunpack.c.l.b16 %v281
    %v384 = vunpack.c.h.b16 %v281
    %v385 = vunpack.c.l.b16 %v282
    %v386 = vunpack.c.h.b16 %v282
    %v387 = vunpack.c.l.b16 %v283
    %v388 = vunpack.c.h.b16 %v283
    %v389 = vunpack.c.l.b16 %v284
    %v390 = vunpack.c.h.b16 %v284
    %v391 = vunpack.c.l.b16 %v285
    %v392 = vunpack.c.h.b16 %v285
    %v393 = vunpack.c.l.b16 %v286
    %v394 = vunpack.c.h.b16 %v286
    %v395 = vunpack.c.l.b16 %v287
    %v396 = vunpack.c.h.b16 %v287
    %v397 = vunpack.c.l.b16 %v288
    %v398 = vunpack.c.h.b16 %v288
    %v399 = vunpack.c.l.b16 %v289
    %v400 = vunpack.c.h.b16 %v289
    %v401 = vunpack.c.l.b16 %v290
    %v402 = vunpack.c.h.b16 %v290
    %v403 = vunpack.c.l.b16 %v291
    %v404 = vunpack.c.h.b16 %v291
    %v405 = vunpack.c.l.b16 %v292
    %v406 = vunpack.c.h.b16 %v292
    %v407 = vunpack.c.l.b16 %v293
    %v408 = vunpack.c.h.b16 %v293
    %v409 = vunpack.c.l.b16 %v294
    %v410 = vunpack.c.h.b16 %v294
    %v411 = vunpack.c.l.b16 %v295
    %v412 = vunpack.c.h.b16 %v295
    %v413 = vunpack.c.l.b16 %v296
    %v414 = vunpack.c.h.b16 %v296
    %v415 = vpack.c.b16 %v355, %v351
    %v416 = vpack.c.b16 %v356, %v352
    %v417 = vpack.c.b16 %v357, %v353
    %v418 = vpack.c.b16 %v358, %v354
    %v419 = vpack.c.b16 %v363, %v359
    %v420 = vpack.c.b16 %v364, %v360
    %v421 = vpack.c.b16 %v365, %v361
    %v422 = vpack.c.b16 %v366, %v362
    %v423 = vpack.c.b16 %v371, %v367
    %v424 = vpack.c.b16 %v372, %v368
    %v425 = vpack.c.b16 %v373, %v369
    %v426 = vpack.c.b16 %v374, %v370
    %v427 = vpack.c.b16 %v379, %v375
    %v428 = vpack.c.b16 %v380, %v376
    %v429 = vpack.c.b16 %v381, %v377
    %v430 = vpack.c.b16 %v382, %v378
    %v431 = vpack.c.b16 %v387, %v383
    %v432 = vpack.c.b16 %v388, %v384
    %v433 = vpack.c.b16 %v389, %v385
    %v434 = vpack.c.b16 %v390, %v386
    %v435 = vpack.c.b16 %v395, %v391
    %v436 = vpack.c.b16 %v396, %v392
    %v437 = vpack.c.b16 %v397, %v393
    %v438 = vpack.c.b16 %v398, %v394
    %v439 = vpack.c.b16 %v403, %v399
    %v440 = vpack.c.b16 %v404, %v400
    %v441 = vpack.c.b16 %v405, %v401
    %v442 = vpack.c.b16 %v406, %v402
    %v443 = vpack.c.b16 %v411, %v407
    %v444 = vpack.c.b16 %v412, %v408
    %v445 = vpack.c.b16 %v413, %v409
    %v446 = vpack.c.b16 %v414, %v410
    %479 = vmatprep.subr.bf16.mxu0 %v416
    %480 = vmatpush1.bf16.msra.mxu0 %v415
    %481 = vmatprep.subr.bf16.mxu0 %v420
    %482 = vmatpush1.bf16.msra.mxu0 %v419
    %483 = vmatprep.subr.bf16.mxu0 %v424
    %484 = vmatpush1.bf16.msra.mxu0 %v423
    %485 = vmatprep.subr.bf16.mxu0 %v428
    %486 = vmatpush1.bf16.msra.mxu0 %v427
    %487 = vmatprep.subr.bf16.mxu0 %v432
    %488 = vmatpush1.bf16.msra.mxu0 %v431
    %489 = vmatprep.subr.bf16.mxu0 %v436
    %490 = vmatpush1.bf16.msra.mxu0 %v435
    %491 = vmatprep.subr.bf16.mxu0 %v440
    %492 = vmatpush1.bf16.msra.mxu0 %v439
    %493 = vmatprep.subr.bf16.mxu0 %v444
    %494 = vmatpush1.bf16.msra.mxu0 %v443
    %495 = vmatprep.subr.bf16.mxu0 0
    %496 = vmatpush1.bf16.msra.mxu0 0
    %497 = vmatprep.subr.bf16.mxu0 0
    %498 = vmatpush1.bf16.msra.mxu0 0
    %499 = vmatprep.subr.bf16.mxu0 0
    %500 = vmatpush1.bf16.msra.mxu0 0
    %501 = vmatprep.subr.bf16.mxu0 0
    %502 = vmatpush1.bf16.msra.mxu0 0
    %503 = vmatprep.subr.bf16.mxu0 0
    %504 = vmatpush1.bf16.msra.mxu0 0
    %505 = vmatprep.subr.bf16.mxu0 0
    %506 = vmatpush1.bf16.msra.mxu0 0
    %507 = vmatprep.subr.bf16.mxu0 0
    %508 = vmatpush1.bf16.msra.mxu0 0
    %509 = vmatprep.subr.bf16.mxu0 0
    %510 = vmatpush1.bf16.msra.mxu0 0
    %511 = vmatprep.mubr.bf16.mxu0 0
    %512 = vmatmul.mubr.bf16.gmra.mrb[0].mxu0 %v264
    %v513 = vpop.f32.mrb[0].mxu0
    %v514 = vadd.f32 %v302, %v513
    %v515 = vpop.f32.mrb[0].mxu0
    %v516 = vadd.f32 %v306, %v515
    %v517 = vpop.f32.mrb[0].mxu0
    %v518 = vpop.f32.mrb[0].mxu0
    %519 = vdwg.mxu0
    %520 = vmatprep.subr.bf16.mxu0 %v418
    %521 = vmatpush1.bf16.msra.mxu0 %v417
    %522 = vmatprep.subr.bf16.mxu0 %v422
    %523 = vmatpush1.bf16.msra.mxu0 %v421
    %524 = vmatprep.subr.bf16.mxu0 %v426
    %525 = vmatpush1.bf16.msra.mxu0 %v425
    %526 = vmatprep.subr.bf16.mxu0 %v430
    %527 = vmatpush1.bf16.msra.mxu0 %v429
    %528 = vmatprep.subr.bf16.mxu0 %v434
    %529 = vmatpush1.bf16.msra.mxu0 %v433
    %530 = vmatprep.subr.bf16.mxu0 %v438
    %531 = vmatpush1.bf16.msra.mxu0 %v437
    %532 = vmatprep.subr.bf16.mxu0 %v442
    %533 = vmatpush1.bf16.msra.mxu0 %v441
    %534 = vmatprep.subr.bf16.mxu0 %v446
    %535 = vmatpush1.bf16.msra.mxu0 %v445
    %536 = vmatprep.subr.bf16.mxu0 0
    %537 = vmatpush1.bf16.msra.mxu0 0
    %538 = vmatprep.subr.bf16.mxu0 0
    %539 = vmatpush1.bf16.msra.mxu0 0
    %540 = vmatprep.subr.bf16.mxu0 0
    %541 = vmatpush1.bf16.msra.mxu0 0
    %542 = vmatprep.subr.bf16.mxu0 0
    %543 = vmatpush1.bf16.msra.mxu0 0
    %544 = vmatprep.subr.bf16.mxu0 0
    %545 = vmatpush1.bf16.msra.mxu0 0
    %546 = vmatprep.subr.bf16.mxu0 0
    %547 = vmatpush1.bf16.msra.mxu0 0
    %548 = vmatprep.subr.bf16.mxu0 0
    %549 = vmatpush1.bf16.msra.mxu0 0
    %550 = vmatprep.subr.bf16.mxu0 0
    %551 = vmatpush1.bf16.msra.mxu0 0
    %552 = vmatprep.mubr.bf16.mxu0 0
    %553 = vmatmul.mubr.bf16.gmra.mrb[0].mxu0 %v264
    %v554 = vpop.f32.mrb[0].mxu0
    %v555 = vadd.f32 %v310, %v554
    %v556 = vpop.f32.mrb[0].mxu0
    %v557 = vadd.f32 %v314, %v556
    %v558 = vpop.f32.mrb[0].mxu0
    %v559 = vpop.f32.mrb[0].mxu0
    %560 = vdwg.mxu0
    %561 = vmax.xlane.f32.xlu0 %v514
    %v562 = vpop.xlane.xlu0 %561
    %v563 = vsub.f32 %v514, %v562
    %v564 = vmul.f32 %v563, 1.442695
    %v565 = vpow.pop %v564
    %566 = vadd.xlane.f32.xlu0 %v565
    %v567 = vpop.xlane.xlu0 %566
    %v568 = vrcp.pop %v567
    %v569 = vmul.f32 %v565, %v568
    %v571 = vcombine.high %v569, %v569
    %v573 = vunpack.c.l.s4 1966171168
    %v574 = vunpack.c.0.s8 %v573
    %v575 = vlaneseq
    %v576 = vshrl.u32 %v575, 7
    %v577 = vsub.s32 %v574, %v576
    %v578 = vrot.slane %v569, %v577
    %v580 = vunpack.c.l.s4 1966171168
    %v581 = vunpack.c.0.s8 %v580
    %v582 = vlaneseq
    %v583 = vshrl.u32 %v582, 7
    %v584 = vsub.s32 %v581, %v583
    %v585 = vrot.slane %v571, %v584
    %v586 = vcombine.high %v578, %v578
    %v587 = vcombine.high %v585, %v585
    %v589 = vunpack.c.l.s4 1966171168
    %v590 = vunpack.c.0.s8 %v589
    %v591 = vlaneseq
    %v592 = vshrl.u32 %v591, 7
    %v593 = vsub.s32 %v590, %v592
    %v594 = vrot.slane %v578, %v593
    %v596 = vunpack.c.l.s4 1966171168
    %v597 = vunpack.c.0.s8 %v596
    %v598 = vlaneseq
    %v599 = vshrl.u32 %v598, 7
    %v600 = vsub.s32 %v597, %v599
    %v601 = vrot.slane %v585, %v600
    %v603 = vunpack.c.l.s4 1966171168
    %v604 = vunpack.c.0.s8 %v603
    %v605 = vlaneseq
    %v606 = vshrl.u32 %v605, 7
    %v607 = vsub.s32 %v604, %v606
    %v608 = vrot.slane %v586, %v607
    %v610 = vunpack.c.l.s4 1966171168
    %v611 = vunpack.c.0.s8 %v610
    %v612 = vlaneseq
    %v613 = vshrl.u32 %v612, 7
    %v614 = vsub.s32 %v611, %v613
    %v615 = vrot.slane %v587, %v614
    %v616 = vcombine.high %v594, %v594
    %v617 = vcombine.high %v601, %v601
    %v618 = vcombine.high %v608, %v608
    %v619 = vcombine.high %v615, %v615
    %vm628 = vcmask 409600
    %629 = vst.msk [vmem:[#allocation10] sm:$0x1] %vm628, %v594
    %630 = vst.msk [vmem:[#allocation10 + $0x4] sm:$0x1] %vm628, %v608
    %631 = vst.msk [vmem:[#allocation10 + $0x8] sm:$0x1] %vm628, %v616
    %632 = vst.msk [vmem:[#allocation10 + $0xc] sm:$0x1] %vm628, %v618
    %633 = vst.msk [vmem:[#allocation10 + $0x10] sm:$0x1] %vm628, %v601
    %634 = vst.msk [vmem:[#allocation10 + $0x14] sm:$0x1] %vm628, %v615
    %635 = vst.msk [vmem:[#allocation10 + $0x18] sm:$0x1] %vm628, %v617
    %636 = vst.msk [vmem:[#allocation10 + $0x1c] sm:$0x1] %vm628, %v619
    %637 = vmax.xlane.f32.xlu0 %v516
    %v638 = vpop.xlane.xlu0 %637
    %v639 = vsub.f32 %v516, %v638
    %v640 = vmul.f32 %v639, 1.442695
    %v641 = vpow.pop %v640
    %642 = vadd.xlane.f32.xlu0 %v641
    %v643 = vpop.xlane.xlu0 %642
    %v644 = vrcp.pop %v643
    %v645 = vmul.f32 %v641, %v644
    %v647 = vcombine.high %v645, %v645
    %v649 = vunpack.c.l.s4 1966171168
    %v650 = vunpack.c.0.s8 %v649
    %v651 = vlaneseq
    %v652 = vshrl.u32 %v651, 7
    %v653 = vsub.s32 %v650, %v652
    %v654 = vrot.slane %v645, %v653
    %v656 = vunpack.c.l.s4 1966171168
    %v657 = vunpack.c.0.s8 %v656
    %v658 = vlaneseq
    %v659 = vshrl.u32 %v658, 7
    %v660 = vsub.s32 %v657, %v659
    %v661 = vrot.slane %v647, %v660
    %v662 = vcombine.high %v654, %v654
    %v663 = vcombine.high %v661, %v661
    %v665 = vunpack.c.l.s4 1966171168
    %v666 = vunpack.c.0.s8 %v665
    %v667 = vlaneseq
    %v668 = vshrl.u32 %v667, 7
    %v669 = vsub.s32 %v666, %v668
    %v670 = vrot.slane %v654, %v669
    %v672 = vunpack.c.l.s4 1966171168
    %v673 = vunpack.c.0.s8 %v672
    %v674 = vlaneseq
    %v675 = vshrl.u32 %v674, 7
    %v676 = vsub.s32 %v673, %v675
    %v677 = vrot.slane %v661, %v676
    %v679 = vunpack.c.l.s4 1966171168
    %v680 = vunpack.c.0.s8 %v679
    %v681 = vlaneseq
    %v682 = vshrl.u32 %v681, 7
    %v683 = vsub.s32 %v680, %v682
    %v684 = vrot.slane %v662, %v683
    %v686 = vunpack.c.l.s4 1966171168
    %v687 = vunpack.c.0.s8 %v686
    %v688 = vlaneseq
    %v689 = vshrl.u32 %v688, 7
    %v690 = vsub.s32 %v687, %v689
    %v691 = vrot.slane %v663, %v690
    %v692 = vcombine.high %v670, %v670
    %v693 = vcombine.high %v677, %v677
    %v694 = vcombine.high %v684, %v684
    %v695 = vcombine.high %v691, %v691
    %704 = vst.msk [vmem:[#allocation10 + $0x1] sm:$0x1] %vm628, %v670
    %705 = vst.msk [vmem:[#allocation10 + $0x5] sm:$0x1] %vm628, %v684
    %706 = vst.msk [vmem:[#allocation10 + $0x9] sm:$0x1] %vm628, %v692
    %707 = vst.msk [vmem:[#allocation10 + $0xd] sm:$0x1] %vm628, %v694
    %708 = vst.msk [vmem:[#allocation10 + $0x11] sm:$0x1] %vm628, %v677
    %709 = vst.msk [vmem:[#allocation10 + $0x15] sm:$0x1] %vm628, %v691
    %710 = vst.msk [vmem:[#allocation10 + $0x19] sm:$0x1] %vm628, %v693
    %711 = vst.msk [vmem:[#allocation10 + $0x1d] sm:$0x1] %vm628, %v695
    %712 = vmax.xlane.f32.xlu0 %v555
    %v713 = vpop.xlane.xlu0 %712
    %v714 = vsub.f32 %v555, %v713
    %v715 = vmul.f32 %v714, 1.442695
    %v716 = vpow.pop %v715
    %717 = vadd.xlane.f32.xlu0 %v716
    %v718 = vpop.xlane.xlu0 %717
    %v719 = vrcp.pop %v718
    %v720 = vmul.f32 %v716, %v719
    %v722 = vcombine.high %v720, %v720
    %v724 = vunpack.c.l.s4 1966171168
    %v725 = vunpack.c.0.s8 %v724
    %v726 = vlaneseq
    %v727 = vshrl.u32 %v726, 7
    %v728 = vsub.s32 %v725, %v727
    %v729 = vrot.slane %v720, %v728
    %v731 = vunpack.c.l.s4 1966171168
    %v732 = vunpack.c.0.s8 %v731
    %v733 = vlaneseq
    %v734 = vshrl.u32 %v733, 7
    %v735 = vsub.s32 %v732, %v734
    %v736 = vrot.slane %v722, %v735
    %v737 = vcombine.high %v729, %v729
    %v738 = vcombine.high %v736, %v736
    %v740 = vunpack.c.l.s4 1966171168
    %v741 = vunpack.c.0.s8 %v740
    %v742 = vlaneseq
    %v743 = vshrl.u32 %v742, 7
    %v744 = vsub.s32 %v741, %v743
    %v745 = vrot.slane %v729, %v744
    %v747 = vunpack.c.l.s4 1966171168
    %v748 = vunpack.c.0.s8 %v747
    %v749 = vlaneseq
    %v750 = vshrl.u32 %v749, 7
    %v751 = vsub.s32 %v748, %v750
    %v752 = vrot.slane %v736, %v751
    %v754 = vunpack.c.l.s4 1966171168
    %v755 = vunpack.c.0.s8 %v754
    %v756 = vlaneseq
    %v757 = vshrl.u32 %v756, 7
    %v758 = vsub.s32 %v755, %v757
    %v759 = vrot.slane %v737, %v758
    %v761 = vunpack.c.l.s4 1966171168
    %v762 = vunpack.c.0.s8 %v761
    %v763 = vlaneseq
    %v764 = vshrl.u32 %v763, 7
    %v765 = vsub.s32 %v762, %v764
    %v766 = vrot.slane %v738, %v765
    %v767 = vcombine.high %v745, %v745
    %v768 = vcombine.high %v752, %v752
    %v769 = vcombine.high %v759, %v759
    %v770 = vcombine.high %v766, %v766
    %779 = vst.msk [vmem:[#allocation10 + $0x2] sm:$0x1] %vm628, %v745
    %780 = vst.msk [vmem:[#allocation10 + $0x6] sm:$0x1] %vm628, %v759
    %781 = vst.msk [vmem:[#allocation10 + $0xa] sm:$0x1] %vm628, %v767
    %782 = vst.msk [vmem:[#allocation10 + $0xe] sm:$0x1] %vm628, %v769
    %783 = vst.msk [vmem:[#allocation10 + $0x12] sm:$0x1] %vm628, %v752
    %784 = vst.msk [vmem:[#allocation10 + $0x16] sm:$0x1] %vm628, %v766
    %785 = vst.msk [vmem:[#allocation10 + $0x1a] sm:$0x1] %vm628, %v768
    %786 = vst.msk [vmem:[#allocation10 + $0x1e] sm:$0x1] %vm628, %v770
    %787 = vmax.xlane.f32.xlu0 %v557
    %v788 = vpop.xlane.xlu0 %787
    %v789 = vsub.f32 %v557, %v788
    %v790 = vmul.f32 %v789, 1.442695
    %v791 = vpow.pop %v790
    %792 = vadd.xlane.f32.xlu0 %v791
    %v793 = vpop.xlane.xlu0 %792
    %v794 = vrcp.pop %v793
    %v795 = vmul.f32 %v791, %v794
    %v797 = vcombine.high %v795, %v795
    %v799 = vunpack.c.l.s4 1966171168
    %v800 = vunpack.c.0.s8 %v799
    %v801 = vlaneseq
    %v802 = vshrl.u32 %v801, 7
    %v803 = vsub.s32 %v800, %v802
    %v804 = vrot.slane %v795, %v803
    %v806 = vunpack.c.l.s4 1966171168
    %v807 = vunpack.c.0.s8 %v806
    %v808 = vlaneseq
    %v809 = vshrl.u32 %v808, 7
    %v810 = vsub.s32 %v807, %v809
    %v811 = vrot.slane %v797, %v810
    %v812 = vcombine.high %v804, %v804
    %v813 = vcombine.high %v811, %v811
    %v815 = vunpack.c.l.s4 1966171168
    %v816 = vunpack.c.0.s8 %v815
    %v817 = vlaneseq
    %v818 = vshrl.u32 %v817, 7
    %v819 = vsub.s32 %v816, %v818
    %v820 = vrot.slane %v804, %v819
    %v822 = vunpack.c.l.s4 1966171168
    %v823 = vunpack.c.0.s8 %v822
    %v824 = vlaneseq
    %v825 = vshrl.u32 %v824, 7
    %v826 = vsub.s32 %v823, %v825
    %v827 = vrot.slane %v811, %v826
    %v829 = vunpack.c.l.s4 1966171168
    %v830 = vunpack.c.0.s8 %v829
    %v831 = vlaneseq
    %v832 = vshrl.u32 %v831, 7
    %v833 = vsub.s32 %v830, %v832
    %v834 = vrot.slane %v812, %v833
    %v836 = vunpack.c.l.s4 1966171168
    %v837 = vunpack.c.0.s8 %v836
    %v838 = vlaneseq
    %v839 = vshrl.u32 %v838, 7
    %v840 = vsub.s32 %v837, %v839
    %v841 = vrot.slane %v813, %v840
    %v842 = vcombine.high %v820, %v820
    %v843 = vcombine.high %v827, %v827
    %v844 = vcombine.high %v834, %v834
    %v845 = vcombine.high %v841, %v841
    %854 = vst.msk [vmem:[#allocation10 + $0x3] sm:$0x1] %vm628, %v820
    %855 = vst.msk [vmem:[#allocation10 + $0x7] sm:$0x1] %vm628, %v834
    %856 = vst.msk [vmem:[#allocation10 + $0xb] sm:$0x1] %vm628, %v842
    %857 = vst.msk [vmem:[#allocation10 + $0xf] sm:$0x1] %vm628, %v844
    %858 = vst.msk [vmem:[#allocation10 + $0x13] sm:$0x1] %vm628, %v827
    %859 = vst.msk [vmem:[#allocation10 + $0x17] sm:$0x1] %vm628, %v841
    %860 = vst.msk [vmem:[#allocation10 + $0x1b] sm:$0x1] %vm628, %v843
    %861 = vst.msk [vmem:[#allocation10 + $0x1f] sm:$0x1] %vm628, %v845
    // Predicated region
    $region46: #{tpu_custom_call.1} parent=1 // pred_check
      _
    $region47: #{tpu_custom_call.1} parent=1 // pred_check_branch
      %863 = sbr.rel (0) target = $region49
    $region48: #{tpu_custom_call.1} parent=1 // pred_region
      %s865 = ssub.s32 512, 512
      %866 = vsyncadd [#allocation4], %s865
      %s867 = sshll.u32 [#allocation10], 4
      %s868 = int_to_ptr.vmem [resolvable:$true] %s867
      %873 = dma.vmem_to_hbm [thread:$0]  %s868, 512, %s7, [#allocation4], 64, 64, 4
    $region49: #{tpu_custom_call.1} parent=1 // pred_fallthru
      _
    // Predicated region
    $region50: #{tpu_custom_call.1} parent=1 // pred_check
      _
    $region51: #{tpu_custom_call.1} parent=1 // pred_check_branch
      %875 = sbr.rel (0) target = $region53
    $region52: #{tpu_custom_call.1} parent=1 // pred_region
      %876 = dma.done [#allocation4], 512
    $region53: #{tpu_custom_call.1} parent=1 // pred_fallthru
      _
    %877 = vsyncpa [#allocation3], 1
    %878 = vsyncpa [#allocation6], 1
    %879 = vsyncpa [#allocation9], 1
    %880 = vsyncpa [#allocation4], 1

</llo_original>
